<compile_context>
chip_gen: v7x
topology: tpu7x:2x2x1
jax: 0.10.0
libtpu: 0.0.40
codegen_flags: <defaults>
</compile_context>

<pallas_src>
import functools

import jax
import jax.numpy as jnp
from jax.experimental import pallas as pl
from jax.experimental.pallas import tpu as pltpu


def _dropout_kernel(x_ref, bits_ref, o_ref, *, threshold: int, inv_keep: float):
    """Inverted dropout on one (block_rows, lane) tile, in native dtype.

    keep element  <=>  uniform_bits >= threshold   (P(keep) = 1 - p)
    kept elements are scaled by 1 / (1 - p); dropped elements become 0.
    """
    x = x_ref[...]
    bits = bits_ref[...]
    keep = bits >= jnp.asarray(threshold, dtype=bits.dtype)
    scale = jnp.asarray(inv_keep, dtype=x.dtype)
    o_ref[...] = jnp.where(keep, x * scale, jnp.zeros_like(x))


def _choose_layout(shape):
    """Pick a lane-dense 2-D (rows, lane) view of the activation tensor."""
    total = 1
    for d in shape:
        total *= d
    hidden = shape[-1]
    if hidden % 128 == 0:
        lane = hidden                 # BERT's 768 / 1024 hidden: already dense
    elif total % 128 == 0:
        lane = 128                    # fold columns so the last dim is lane-dense
    else:
        lane = hidden                 # fallback: full-extent last dim (allowed)
    return total // lane, lane


def _choose_block_rows(rows: int, lane: int, itemsize: int) -> int:
    """Row tile: multiple of 8, ~2 MiB of activations per buffer.

    With (x, bits, out) each double-buffered this stays under the 16 MiB
    scoped-VMEM default on v5e and comfortably under v6e / v7x budgets while
    amortizing the ~0.35 us per-grid-step pipeline overhead.
    """
    if rows <= 8:
        return rows                   # full first dim (allowed for any size)
    target_block_bytes = 2 * 1024 * 1024
    br = max(8, target_block_bytes // (lane * itemsize))
    br = (br // 8) * 8
    cap = rows if rows % 8 == 0 else (rows // 8) * 8
    return max(8, min(br, cap))


def dropout_forward(outputs, hidden_dropout_prob: float, seed: int = 0,
                    training: bool = True):
    """Mirrors Dropout.forward: applies dropout to outputs[0]."""
    x = outputs[0]
    p = float(hidden_dropout_prob)

    if (not training) or p == 0.0:
        return x                      # identity (eval mode / p == 0)
    if p >= 1.0:
        return jnp.zeros_like(x)

    orig_shape = x.shape
    itemsize = jnp.dtype(x.dtype).itemsize
    rows, lane = _choose_layout(orig_shape)
    x2d = x.reshape(rows, lane)

    # Random words matched to the element width: 16-bit for bf16/f16 (half the
    # PRNG/bits traffic), 32-bit otherwise.
    if itemsize == 2:
        bits_dtype, nbits = jnp.uint16, 16
    else:
        bits_dtype, nbits = jnp.uint32, 32
    threshold = min(int(p * (2 ** nbits)), (2 ** nbits) - 1)

    key = jax.random.PRNGKey(seed)
    bits = jax.random.bits(key, (rows, lane), dtype=bits_dtype)

    block_rows = _choose_block_rows(rows, lane, itemsize)
    grid = (pl.cdiv(rows, block_rows),)

    out2d = pl.pallas_call(
        functools.partial(_dropout_kernel, threshold=threshold,
                          inv_keep=1.0 / (1.0 - p)),
        out_shape=jax.ShapeDtypeStruct((rows, lane), x.dtype),
        grid=grid,
        in_specs=[
            pl.BlockSpec((block_rows, lane), lambda i: (i, 0)),
            pl.BlockSpec((block_rows, lane), lambda i: (i, 0)),
        ],
        out_specs=pl.BlockSpec((block_rows, lane), lambda i: (i, 0)),
        compiler_params=pltpu.CompilerParams(
            dimension_semantics=("parallel",),      # independent tiles -> megacore OK
            vmem_limit_bytes=32 * 1024 * 1024,
        ),
    )(x2d, bits)

    return out2d.reshape(orig_shape)


if __name__ == "__main__":
    key = jax.random.PRNGKey(0)
    batch, seq_len, hidden = 2, 8, 32
    hidden_dropout_prob = 0.1

    x = jax.random.normal(key, (batch, seq_len, hidden), dtype=jnp.float32)
    # The PyTorch module receives a tuple `outputs` and uses outputs[0].
    outputs = (x,)

    y = dropout_forward(outputs, hidden_dropout_prob, seed=1234, training=True)
    y = jax.block_until_ready(y)

    assert y.shape == x.shape and y.dtype == x.dtype

    # Sanity: surviving elements are exactly x / (1 - p); dropped are 0.
    scale = 1.0 / (1.0 - hidden_dropout_prob)
    kept = y != 0
    assert bool(jnp.allclose(jnp.where(kept, y, 0.0),
                             jnp.where(kept, x * scale, 0.0),
                             rtol=1e-5, atol=1e-6))

    # Eval mode is the identity.
    y_eval = dropout_forward(outputs, hidden_dropout_prob, training=False)
    assert bool(jnp.array_equal(y_eval, x))

    print("KERNEL_OK")
</pallas_src>

<mosaic_0001>
module attributes {stable_mosaic.version = 11 : i64} {
  func.func @_dropout_kernel(%arg0: i32, %arg1: memref<4x128xf32, #tpu.memory_space<vmem>>, %arg2: memref<4x128xi32, #tpu.memory_space<vmem>>, %arg3: memref<4x128xf32, #tpu.memory_space<vmem>>) attributes {dimension_semantics = [#tpu.dimension_semantics<parallel>], iteration_bounds = array<i64: 1>, scalar_prefetch = 0 : i64, scratch_operands = 0 : i64, tpu.core_type = #tpu.core_type<tc>, window_params = [{transform_indices = @transform_0, window_bounds = array<i64: 4, 128>}, {transform_indices = @transform_1, window_bounds = array<i64: 4, 128>}, {transform_indices = @transform_2, window_bounds = array<i64: 4, 128>}]} {
    %c0 = arith.constant 0 : index
    %c0_0 = arith.constant 0 : index
    %0 = vector.load %arg1[%c0, %c0_0] : memref<4x128xf32, #tpu.memory_space<vmem>>, vector<4x128xf32>
    %c0_1 = arith.constant 0 : index
    %c0_2 = arith.constant 0 : index
    %1 = vector.load %arg2[%c0_1, %c0_2] : memref<4x128xi32, #tpu.memory_space<vmem>>, vector<4x128xi32>
    %c429496729_i32 = arith.constant 429496729 : i32
    %2 = vector.broadcast %c429496729_i32 : i32 to vector<4x128xi32>
    %3 = arith.cmpi uge, %1, %2 : vector<4x128xi32>
    %cst = arith.constant 1.11111116 : f32
    %4 = vector.broadcast %cst : f32 to vector<4x128xf32>
    %5 = arith.mulf %0, %4 : vector<4x128xf32>
    %cst_3 = arith.constant 0.000000e+00 : f32
    %6 = vector.broadcast %cst_3 : f32 to vector<4x128xf32>
    %7 = arith.select %3, %5, %6 : vector<4x128xi1>, vector<4x128xf32>
    %c0_4 = arith.constant 0 : index
    %c0_5 = arith.constant 0 : index
    %8 = vector.load %arg3[%c0_4, %c0_5] : memref<4x128xf32, #tpu.memory_space<vmem>>, vector<4x128xf32>
    tpu.vector_store %arg3[%c0_4, %c0_5], %7 {strides = array<i32>} : memref<4x128xf32, #tpu.memory_space<vmem>>, vector<4x128xf32>,
    return
  }
  func.func @transform_0(%arg0: i32) -> (i32, i32) {
    %c0_i32 = arith.constant 0 : i32
    %c0_i32_0 = arith.constant 0 : i32
    return %arg0, %c0_i32 : i32, i32
  }
  func.func @transform_1(%arg0: i32) -> (i32, i32) {
    %c0_i32 = arith.constant 0 : i32
    %c0_i32_0 = arith.constant 0 : i32
    return %arg0, %c0_i32 : i32, i32
  }
  func.func @transform_2(%arg0: i32) -> (i32, i32) {
    %c0_i32 = arith.constant 0 : i32
    %c0_i32_0 = arith.constant 0 : i32
    return %arg0, %c0_i32 : i32, i32
  }
}

</mosaic_0001>

<llo_original>
// kernel: tpu_custom_call.1
$region0: #{tpu_custom_call.1}
  #allocation0 [shape = 'u32[]', space=smem, size = 0x4, offset = 0x4, fixed_abs, tag = 'smem constant byte address 0x4 - core index']
  #allocation1 [shape = 'u32[144,128]{1,0:T(1,128)}', space=vmem, size = 0x12000, scoped, tag = 'internal scratch']
  %s0 = inlined_call_operand.hbm [shape: f32[4,128], index: 0, kind: input, shape index: {}]
  %s1 = inlined_call_operand.hbm [shape: u32[4,128], index: 1, kind: input, shape index: {}]
  %s2 = inlined_call_operand.hbm [shape: f32[4,128], index: 2, kind: output, shape index: {}]
  %s3 = sld [smem:[#allocation0]]
  $region26: #{tpu_custom_call.1} parent=0
    _
  %s5 = ssub.s32 1, %s3
  %s6 = scalar_select 0, %s5, %s3
  $region1: #{tpu_custom_call.1} parent=0
    #allocation2 [shape = 'u8[2048]{0}', space=vmem, size = 0x800, scoped, tag = 'input window, operand 0, single buffered']
    #allocation3 [shape = 's32[1]{0}', space=sflag, size = 0x4, scoped, tag = 'scoped memory for tpu_custom_call.1']
    #allocation4 [shape = 's32[1]{0}', space=sflag, size = 0x4, scoped, tag = 'scoped memory for tpu_custom_call.1']
    #allocation5 [shape = 'u8[2048]{0}', space=vmem, size = 0x800, scoped, tag = 'input window, operand 1, single buffered']
    #allocation6 [shape = 's32[1]{0}', space=sflag, size = 0x4, scoped, tag = 'scoped memory for tpu_custom_call.1']
    #allocation7 [shape = 'u8[2048]{0}', space=vmem, size = 0x800, scoped, tag = 'output window, operand 0, single buffered']
    %7 = vsyncpa [#allocation3], 0
    %8 = vsyncpa [#allocation6], 0
    %9 = vsyncpa [#allocation4], 0
    // Predicated region
    $region2: #{tpu_custom_call.1} parent=1 // pred_check
      _
    $region3: #{tpu_custom_call.1} parent=1 // pred_check_branch
      %11 = sbr.rel (0) target = $region5
    $region4: #{tpu_custom_call.1} parent=1 // pred_region
      %s13 = ssub.s32 64, 64
      %14 = vsyncadd [#allocation3], %s13
      %s16 = sshll.u32 [#allocation2], 4
      %s17 = int_to_ptr.vmem [resolvable:$true] %s16
      %19 = dma.hbm_to_vmem [thread:$0]  %s0, 64, %s17, [#allocation3]
    $region5: #{tpu_custom_call.1} parent=1 // pred_fallthru
      _
    // Predicated region
    $region6: #{tpu_custom_call.1} parent=1 // pred_check
      _
    $region7: #{tpu_custom_call.1} parent=1 // pred_check_branch
      %21 = sbr.rel (0) target = $region9
    $region8: #{tpu_custom_call.1} parent=1 // pred_region
      %s23 = ssub.s32 64, 64
      %24 = vsyncadd [#allocation6], %s23
      %s26 = sshll.u32 [#allocation5], 4
      %s27 = int_to_ptr.vmem [resolvable:$true] %s26
      %29 = dma.hbm_to_vmem [thread:$0]  %s1, 64, %s27, [#allocation6]
    $region9: #{tpu_custom_call.1} parent=1 // pred_fallthru
      _
    // Predicated region
    $region10: #{tpu_custom_call.1} parent=1 // pred_check
      _
    $region11: #{tpu_custom_call.1} parent=1 // pred_check_branch
      %31 = sbr.rel (0) target = $region13
    $region12: #{tpu_custom_call.1} parent=1 // pred_region
      %32 = dma.done [#allocation3], 64
    $region13: #{tpu_custom_call.1} parent=1 // pred_fallthru
      _
    // Predicated region
    $region14: #{tpu_custom_call.1} parent=1 // pred_check
      _
    $region15: #{tpu_custom_call.1} parent=1 // pred_check_branch
      %34 = sbr.rel (0) target = $region17
    $region16: #{tpu_custom_call.1} parent=1 // pred_region
      %35 = dma.done [#allocation6], 64
    $region17: #{tpu_custom_call.1} parent=1 // pred_fallthru
      _
    %v36 = vld [vmem:[#allocation2] sm:$0xf]
    %v37 = vld [vmem:[#allocation5] sm:$0xf]
    %vm38 = vcmp.ge.u32.totalorder %v37, 429496729
    %v39 = vmul.f32 %v36, 1.1111112
    %v40 = vsel %vm38, %v39, 0.0
    %41 = vst [vmem:[#allocation7] sm:$0xf] %v40
    // Predicated region
    $region18: #{tpu_custom_call.1} parent=1 // pred_check
      _
    $region19: #{tpu_custom_call.1} parent=1 // pred_check_branch
      %43 = sbr.rel (0) target = $region21
    $region20: #{tpu_custom_call.1} parent=1 // pred_region
      %s45 = ssub.s32 64, 64
      %46 = vsyncadd [#allocation4], %s45
      %s48 = sshll.u32 [#allocation7], 4
      %s49 = int_to_ptr.vmem [resolvable:$true] %s48
      %51 = dma.vmem_to_hbm [thread:$0]  %s49, 64, %s2, [#allocation4]
    $region21: #{tpu_custom_call.1} parent=1 // pred_fallthru
      _
    // Predicated region
    $region22: #{tpu_custom_call.1} parent=1 // pred_check
      _
    $region23: #{tpu_custom_call.1} parent=1 // pred_check_branch
      %53 = sbr.rel (0) target = $region25
    $region24: #{tpu_custom_call.1} parent=1 // pred_region
      %54 = dma.done [#allocation4], 64
    $region25: #{tpu_custom_call.1} parent=1 // pred_fallthru
      _
    %55 = vsyncpa [#allocation3], 1
    %56 = vsyncpa [#allocation6], 1
    %57 = vsyncpa [#allocation4], 1

</llo_original>
